<compile_context>
chip_gen: v5e
topology: v5e:2x2
jax: 0.10.0
libtpu: 0.0.40
codegen_flags: <defaults>
</compile_context>

<pallas_src>
import functools

import jax
import jax.numpy as jnp
from jax import lax
from jax.experimental import pallas as pl
from jax.experimental.pallas import tpu as pltpu


def _conv3x3_bias_relu_kernel(x_ref, w_ref, b_ref, o_ref, patches_ref, *,
                              H, W, cin, cpad, nb, compute_dtype):
    """One batch-block (NB images) per grid step.

    x_ref:       (NB, Cin, H*W)       flattened NCHW images, spatial on lanes
    w_ref:       (Cout, 9*CPAD)       weight slab, tap-major / padded-cin-minor
    b_ref:       (Cout, 1)            bias (f32)
    o_ref:       (NB, Cout, H*W)      flattened NCHW output
    patches_ref: (9*CPAD, NB*H*W)     im2col scratch (VMEM), fully rewritten
                                      every grid step.
    """
    HW = H * W
    wp = W + 1  # lane halo width: covers shifts in [-(W+1), W+1]

    # Column index of every flattened spatial position (hoisted, computed once
    # per grid step) for horizontal-boundary masking.
    col = lax.broadcasted_iota(jnp.int32, (1, HW), 1) % W
    not_left = col >= 1          # valid output columns when dw == -1
    not_right = col <= (W - 2)   # valid output columns when dw == +1

    zero_rows = cpad - cin
    for n in range(nb):
        x_n = x_ref[n].astype(compute_dtype)                       # (Cin, HW)
        if zero_rows:
            # Pad the channel (sublane) dim once per image so every tap store
            # is a full, sublane-aligned CPAD-row slab.
            x_n = jnp.concatenate(
                [x_n, jnp.zeros((zero_rows, HW), compute_dtype)], axis=0)
        halo = jnp.zeros((cpad, wp), compute_dtype)
        # Lane-halo'd image: positions outside [0, HW) read zeros, which
        # realizes the vertical zero padding for the dh = +/-1 taps.
        xw = jnp.concatenate([halo, x_n, halo], axis=1)            # (CPAD, HW+2*wp)

        tap_idx = 0
        for dh in (-1, 0, 1):
            for dw in (-1, 0, 1):
                start = wp + dh * W + dw
                tap = xw[:, start:start + HW]                      # (CPAD, HW)
                # Horizontal row-wrap positions must be zeroed explicitly.
                if dw == -1:
                    tap = jnp.where(not_left, tap, jnp.zeros_like(tap))
                elif dw == 1:
                    tap = jnp.where(not_right, tap, jnp.zeros_like(tap))
                # Aligned full-slab store: sublane offset is a multiple of the
                # packing (CPAD), lane offset a multiple of 128 (HW % 128 == 0
                # whenever nb > 1).
                patches_ref[tap_idx * cpad:(tap_idx + 1) * cpad,
                            n * HW:(n + 1) * HW] = tap
                tap_idx += 1

    # Single deep-K MXU matmul: (Cout, 9*CPAD) @ (9*CPAD, NB*HW), f32 accum.
    acc = jnp.dot(w_ref[...], patches_ref[...],
                  preferred_element_type=jnp.float32)              # (Cout, NB*HW)
    acc = jnp.maximum(acc + b_ref[...], 0.0)                       # bias+ReLU in f32
    for n in range(nb):
        o_ref[n] = acc[:, n * HW:(n + 1) * HW].astype(o_ref.dtype)


def prepare_basic2d_params(weight_oihw, bias, compute_dtype=jnp.float32):
    """Hoisted, one-time parameter prep (weight slab transpose/pad + bias col)."""
    compute_dtype = jnp.dtype(compute_dtype)
    Cout, Cin, KH, KW = weight_oihw.shape
    assert (KH, KW) == (3, 3), "kernel assumes 3x3, pad=1, stride=1"
    pack = 16 if compute_dtype == jnp.dtype(jnp.bfloat16) else 8
    cpad = ((Cin + pack - 1) // pack) * pack
    # Slab: A[co, (kh*3 + kw)*CPAD + ci] = weight[co, ci, kh, kw]; padded ci
    # columns are zero (they pair with the zero-padded patches rows).
    w_p = jnp.transpose(weight_oihw, (0, 2, 3, 1))                 # (Cout,KH,KW,Cin)
    w_p = jnp.pad(w_p, ((0, 0), (0, 0), (0, 0), (0, cpad - Cin)))
    w_slab = w_p.reshape(Cout, KH * KW * cpad).astype(compute_dtype)
    b_col = bias.reshape(Cout, 1).astype(jnp.float32)
    return {
        "w_slab": w_slab, "b_col": b_col,
        "cin": Cin, "cpad": cpad, "cout": Cout,
        "compute_dtype": compute_dtype,
    }


def _pick_batch_block(N, HW, itemsize, krows):
    """How many images to fuse per grid step."""
    if HW % 128 != 0:
        # Keep lane offsets of the per-image scratch stores 128-aligned.
        return 1
    nb = max(1, min(N, 8, max(1, 2048 // HW)))     # target ~2048-lane matmuls
    while nb > 1 and krows * nb * HW * itemsize > (8 << 20):
        nb -= 1                                     # keep patches scratch modest
    while N % nb:
        nb -= 1
    return max(nb, 1)


def _pick_vmem_limit():
    """Bigger blocks on v5e/v6e (128 MiB physical), conservative on v7x (64 MiB)."""
    default = 48 * 1024 * 1024
    try:
        phys = int(pltpu.get_tpu_info().vmem_capacity_bytes)
    except Exception:
        return default
    return max(32 * 1024 * 1024, min(96 * 1024 * 1024, (phys * 3) // 4))


def basic2d_forward(x_nchw, params):
    """Basic2d(in_c, out_c) forward with default args
    (norm_layer=None -> Conv2d(k=3, s=1, p=1, bias=True) followed by ReLU)."""
    N, Cin, H, W = x_nchw.shape
    assert Cin == params["cin"]
    HW = H * W
    cpad, Cout = params["cpad"], params["cout"]
    cd = params["compute_dtype"]
    krows = 9 * cpad
    nb = _pick_batch_block(N, HW, cd.itemsize, krows)

    x_flat = x_nchw.reshape(N, Cin, HW)            # free contiguous reshape
    w_slab, b_col = params["w_slab"], params["b_col"]

    kernel = functools.partial(
        _conv3x3_bias_relu_kernel,
        H=H, W=W, cin=Cin, cpad=cpad, nb=nb, compute_dtype=cd)

    out_dtype = x_nchw.dtype
    bytes_accessed = (x_flat.size * x_flat.dtype.itemsize
                      + w_slab.size * w_slab.dtype.itemsize
                      + b_col.size * 4
                      + N * Cout * HW * jnp.dtype(out_dtype).itemsize)

    out_flat = pl.pallas_call(
        kernel,
        out_shape=jax.ShapeDtypeStruct((N, Cout, HW), out_dtype),
        grid=(N // nb,),
        in_specs=[
            pl.BlockSpec((nb, Cin, HW), lambda b: (b, 0, 0)),
            pl.BlockSpec((Cout, krows), lambda b: (0, 0)),
            pl.BlockSpec((Cout, 1), lambda b: (0, 0)),
        ],
        out_specs=pl.BlockSpec((nb, Cout, HW), lambda b: (b, 0, 0)),
        scratch_shapes=[pltpu.VMEM((krows, nb * HW), cd)],
        compiler_params=pltpu.CompilerParams(
            dimension_semantics=("parallel",),     # batch blocks across cores
            vmem_limit_bytes=_pick_vmem_limit()),
        cost_estimate=pl.CostEstimate(
            flops=2 * 9 * Cin * Cout * HW * N,
            transcendentals=0,
            bytes_accessed=bytes_accessed),
    )(x_flat, w_slab, b_col)

    return out_flat.reshape(N, Cout, H, W)         # free contiguous split


def reference_forward(x_nchw, weight_oihw, bias, *, padding=1):
    """Pure-JAX reference (lax conv) for correctness checking."""
    out = lax.conv_general_dilated(
        x_nchw, weight_oihw,
        window_strides=(1, 1),
        padding=[(padding, padding), (padding, padding)],
        dimension_numbers=('NCHW', 'OIHW', 'NCHW'))
    out = out + bias[None, :, None, None]
    return jnp.maximum(out, 0.0)


if __name__ == "__main__":
    # Basic2d(in_channels=4, out_channels=8) at small deterministic shapes.
    N, Cin, Cout, H, W = 2, 4, 8, 16, 16
    K = 3

    key = jax.random.PRNGKey(0)
    kx, kw, kb = jax.random.split(key, 3)

    x = jax.random.normal(kx, (N, Cin, H, W), dtype=jnp.float32)

    # PyTorch-style init: uniform(-1/sqrt(fan_in), 1/sqrt(fan_in))
    fan_in = Cin * K * K
    bound = 1.0 / (fan_in ** 0.5)
    weight = jax.random.uniform(kw, (Cout, Cin, K, K), jnp.float32, -bound, bound)
    bias = jax.random.uniform(kb, (Cout,), jnp.float32, -bound, bound)

    # --- f32 path (exact semantics of the PyTorch module) ---
    params_f32 = prepare_basic2d_params(weight, bias, compute_dtype=jnp.float32)
    out = jax.block_until_ready(basic2d_forward(x, params_f32))
    ref = jax.block_until_ready(reference_forward(x, weight, bias))
    assert out.shape == (N, Cout, H, W)
    assert jnp.allclose(out, ref, atol=1e-5, rtol=1e-5), "f32 mismatch vs reference"

    # --- bf16 compute path (halves HBM traffic; f32 accumulation/epilogue) ---
    x_bf16 = x.astype(jnp.bfloat16)
    params_bf16 = prepare_basic2d_params(weight, bias, compute_dtype=jnp.bfloat16)
    out_bf = jax.block_until_ready(basic2d_forward(x_bf16, params_bf16))
    ref_bf = reference_forward(x_bf16.astype(jnp.float32),
                               weight.astype(jnp.bfloat16).astype(jnp.float32), bias)
    assert out_bf.shape == (N, Cout, H, W)
    assert jnp.allclose(out_bf.astype(jnp.float32), ref_bf, atol=3e-2, rtol=3e-2), \
        "bf16 mismatch vs reference"

    print("KERNEL_OK")
</pallas_src>

<mosaic_0001>
module attributes {stable_mosaic.version = 11 : i64} {
  func.func @_conv3x3_bias_relu_kernel(%arg0: i32, %arg1: memref<2x4x256xf32, #tpu.memory_space<vmem>>, %arg2: memref<8x72xf32, #tpu.memory_space<vmem>>, %arg3: memref<8x1xf32, #tpu.memory_space<vmem>>, %arg4: memref<2x8x256xf32, #tpu.memory_space<vmem>>, %arg5: memref<72x512xf32, #tpu.memory_space<vmem>>) attributes {dimension_semantics = [#tpu.dimension_semantics<parallel>], iteration_bounds = array<i64: 1>, scalar_prefetch = 0 : i64, scratch_operands = 1 : i64, tpu.core_type = #tpu.core_type<tc>, window_params = [{transform_indices = @transform_0, window_bounds = array<i64: 2, 4, 256>}, {pipeline_mode = #tpu.pipeline_mode<synchronous>, transform_indices = @transform_1, window_bounds = array<i64: 8, 72>}, {pipeline_mode = #tpu.pipeline_mode<synchronous>, transform_indices = @transform_2, window_bounds = array<i64: 8, 1>}, {transform_indices = @transform_3, window_bounds = array<i64: 2, 8, 256>}]} {
    %0 = tpu.iota {dimensions = array<i32: 1>} : vector<1x256xi32>
    %c16_i32 = arith.constant 16 : i32
    %c0_i32 = arith.constant 0 : i32
    %1 = arith.cmpi eq, %c16_i32, %c0_i32 : i32
    %c1_i32 = arith.constant 1 : i32
    %2 = arith.select %1, %c1_i32, %c16_i32 : i32
    %3 = vector.broadcast %2 : i32 to vector<1x256xi32>
    %4 = arith.remsi %0, %3 : vector<1x256xi32>
    %c0_i32_0 = arith.constant 0 : i32
    %5 = vector.broadcast %c0_i32_0 : i32 to vector<1x256xi32>
    %6 = arith.cmpi ne, %4, %5 : vector<1x256xi32>
    %c0_i32_1 = arith.constant 0 : i32
    %7 = vector.broadcast %c0_i32_1 : i32 to vector<1x256xi32>
    %8 = arith.cmpi slt, %4, %7 : vector<1x256xi32>
    %c0_i32_2 = arith.constant 0 : i32
    %9 = arith.cmpi slt, %2, %c0_i32_2 : i32
    %10 = vector.broadcast %9 : i1 to vector<1x256xi1>
    %11 = vector.broadcast %10 : vector<1x256xi1> to vector<1x256xi1>
    %12 = arith.xori %8, %11 : vector<1x256xi1>
    %13 = arith.andi %12, %6 : vector<1x256xi1>
    %14 = vector.broadcast %2 : i32 to vector<1x256xi32>
    %15 = arith.addi %4, %14 : vector<1x256xi32>
    %16 = arith.select %13, %15, %4 : vector<1x256xi1>, vector<1x256xi32>
    %c1_i32_3 = arith.constant 1 : i32
    %17 = vector.broadcast %c1_i32_3 : i32 to vector<1x256xi32>
    %18 = arith.cmpi sge, %16, %17 : vector<1x256xi32>
    %c14_i32 = arith.constant 14 : i32
    %19 = vector.broadcast %c14_i32 : i32 to vector<1x256xi32>
    %20 = arith.cmpi sle, %16, %19 : vector<1x256xi32>
    %c0 = arith.constant 0 : index
    %c0_4 = arith.constant 0 : index
    %c0_5 = arith.constant 0 : index
    %21 = vector.load %arg1[%c0, %c0_4, %c0_5] : memref<2x4x256xf32, #tpu.memory_space<vmem>>, vector<1x4x256xf32>
    %22 = vector.shape_cast %21 : vector<1x4x256xf32> to vector<4x256xf32>
    %cst = arith.constant 0.000000e+00 : f32
    %23 = vector.broadcast %cst : f32 to vector<4x256xf32>
    %24 = tpu.concatenate %22, %23 in 0 : vector<4x256xf32>, vector<4x256xf32> -> vector<8x256xf32>
    %cst_6 = arith.constant 0.000000e+00 : f32
    %25 = vector.broadcast %cst_6 : f32 to vector<8x17xf32>
    %26 = tpu.concatenate %25, %24, %25 in 1 : vector<8x17xf32>, vector<8x256xf32>, vector<8x17xf32> -> vector<8x290xf32>
    %27 = vector.extract_strided_slice %26 {offsets = [0, 0], sizes = [8, 256], strides = [1, 1]} : vector<8x290xf32> to vector<8x256xf32>
    %cst_7 = arith.constant 0.000000e+00 : f32
    %28 = vector.broadcast %cst_7 : f32 to vector<8x256xf32>
    %29 = vector.shape_cast %18 : vector<1x256xi1> to vector<1x256xi1>
    %30 = vector.broadcast %29 : vector<1x256xi1> to vector<8x256xi1>
    %31 = arith.select %30, %27, %28 : vector<8x256xi1>, vector<8x256xf32>
    %c0_8 = arith.constant 0 : index
    %c0_9 = arith.constant 0 : index
    %32 = vector.load %arg5[%c0_8, %c0_9] : memref<72x512xf32, #tpu.memory_space<vmem>>, vector<8x256xf32>
    tpu.vector_store %arg5[%c0_8, %c0_9], %31 {strides = array<i32>} : memref<72x512xf32, #tpu.memory_space<vmem>>, vector<8x256xf32>,
    %33 = vector.extract_strided_slice %26 {offsets = [0, 1], sizes = [8, 256], strides = [1, 1]} : vector<8x290xf32> to vector<8x256xf32>
    %c8 = arith.constant 8 : index
    %c0_10 = arith.constant 0 : index
    %34 = vector.load %arg5[%c8, %c0_10] : memref<72x512xf32, #tpu.memory_space<vmem>>, vector<8x256xf32>
    tpu.vector_store %arg5[%c8, %c0_10], %33 {strides = array<i32>} : memref<72x512xf32, #tpu.memory_space<vmem>>, vector<8x256xf32>,
    %35 = vector.extract_strided_slice %26 {offsets = [0, 2], sizes = [8, 256], strides = [1, 1]} : vector<8x290xf32> to vector<8x256xf32>
    %cst_11 = arith.constant 0.000000e+00 : f32
    %36 = vector.broadcast %cst_11 : f32 to vector<8x256xf32>
    %37 = vector.shape_cast %20 : vector<1x256xi1> to vector<1x256xi1>
    %38 = vector.broadcast %37 : vector<1x256xi1> to vector<8x256xi1>
    %39 = arith.select %38, %35, %36 : vector<8x256xi1>, vector<8x256xf32>
    %c16 = arith.constant 16 : index
    %c0_12 = arith.constant 0 : index
    %40 = vector.load %arg5[%c16, %c0_12] : memref<72x512xf32, #tpu.memory_space<vmem>>, vector<8x256xf32>
    tpu.vector_store %arg5[%c16, %c0_12], %39 {strides = array<i32>} : memref<72x512xf32, #tpu.memory_space<vmem>>, vector<8x256xf32>,
    %41 = vector.extract_strided_slice %26 {offsets = [0, 16], sizes = [8, 256], strides = [1, 1]} : vector<8x290xf32> to vector<8x256xf32>
    %cst_13 = arith.constant 0.000000e+00 : f32
    %42 = vector.broadcast %cst_13 : f32 to vector<8x256xf32>
    %43 = vector.shape_cast %18 : vector<1x256xi1> to vector<1x256xi1>
    %44 = vector.broadcast %43 : vector<1x256xi1> to vector<8x256xi1>
    %45 = arith.select %44, %41, %42 : vector<8x256xi1>, vector<8x256xf32>
    %c24 = arith.constant 24 : index
    %c0_14 = arith.constant 0 : index
    %46 = vector.load %arg5[%c24, %c0_14] : memref<72x512xf32, #tpu.memory_space<vmem>>, vector<8x256xf32>
    tpu.vector_store %arg5[%c24, %c0_14], %45 {strides = array<i32>} : memref<72x512xf32, #tpu.memory_space<vmem>>, vector<8x256xf32>,
    %47 = vector.extract_strided_slice %26 {offsets = [0, 17], sizes = [8, 256], strides = [1, 1]} : vector<8x290xf32> to vector<8x256xf32>
    %c32 = arith.constant 32 : index
    %c0_15 = arith.constant 0 : index
    %48 = vector.load %arg5[%c32, %c0_15] : memref<72x512xf32, #tpu.memory_space<vmem>>, vector<8x256xf32>
    tpu.vector_store %arg5[%c32, %c0_15], %47 {strides = array<i32>} : memref<72x512xf32, #tpu.memory_space<vmem>>, vector<8x256xf32>,
    %49 = vector.extract_strided_slice %26 {offsets = [0, 18], sizes = [8, 256], strides = [1, 1]} : vector<8x290xf32> to vector<8x256xf32>
    %cst_16 = arith.constant 0.000000e+00 : f32
    %50 = vector.broadcast %cst_16 : f32 to vector<8x256xf32>
    %51 = vector.shape_cast %20 : vector<1x256xi1> to vector<1x256xi1>
    %52 = vector.broadcast %51 : vector<1x256xi1> to vector<8x256xi1>
    %53 = arith.select %52, %49, %50 : vector<8x256xi1>, vector<8x256xf32>
    %c40 = arith.constant 40 : index
    %c0_17 = arith.constant 0 : index
    %54 = vector.load %arg5[%c40, %c0_17] : memref<72x512xf32, #tpu.memory_space<vmem>>, vector<8x256xf32>
    tpu.vector_store %arg5[%c40, %c0_17], %53 {strides = array<i32>} : memref<72x512xf32, #tpu.memory_space<vmem>>, vector<8x256xf32>,
    %55 = vector.extract_strided_slice %26 {offsets = [0, 32], sizes = [8, 256], strides = [1, 1]} : vector<8x290xf32> to vector<8x256xf32>
    %cst_18 = arith.constant 0.000000e+00 : f32
    %56 = vector.broadcast %cst_18 : f32 to vector<8x256xf32>
    %57 = vector.shape_cast %18 : vector<1x256xi1> to vector<1x256xi1>
    %58 = vector.broadcast %57 : vector<1x256xi1> to vector<8x256xi1>
    %59 = arith.select %58, %55, %56 : vector<8x256xi1>, vector<8x256xf32>
    %c48 = arith.constant 48 : index
    %c0_19 = arith.constant 0 : index
    %60 = vector.load %arg5[%c48, %c0_19] : memref<72x512xf32, #tpu.memory_space<vmem>>, vector<8x256xf32>
    tpu.vector_store %arg5[%c48, %c0_19], %59 {strides = array<i32>} : memref<72x512xf32, #tpu.memory_space<vmem>>, vector<8x256xf32>,
    %61 = vector.extract_strided_slice %26 {offsets = [0, 33], sizes = [8, 256], strides = [1, 1]} : vector<8x290xf32> to vector<8x256xf32>
    %c56 = arith.constant 56 : index
    %c0_20 = arith.constant 0 : index
    %62 = vector.load %arg5[%c56, %c0_20] : memref<72x512xf32, #tpu.memory_space<vmem>>, vector<8x256xf32>
    tpu.vector_store %arg5[%c56, %c0_20], %61 {strides = array<i32>} : memref<72x512xf32, #tpu.memory_space<vmem>>, vector<8x256xf32>,
    %63 = vector.extract_strided_slice %26 {offsets = [0, 34], sizes = [8, 256], strides = [1, 1]} : vector<8x290xf32> to vector<8x256xf32>
    %cst_21 = arith.constant 0.000000e+00 : f32
    %64 = vector.broadcast %cst_21 : f32 to vector<8x256xf32>
    %65 = vector.shape_cast %20 : vector<1x256xi1> to vector<1x256xi1>
    %66 = vector.broadcast %65 : vector<1x256xi1> to vector<8x256xi1>
    %67 = arith.select %66, %63, %64 : vector<8x256xi1>, vector<8x256xf32>
    %c64 = arith.constant 64 : index
    %c0_22 = arith.constant 0 : index
    %68 = vector.load %arg5[%c64, %c0_22] : memref<72x512xf32, #tpu.memory_space<vmem>>, vector<8x256xf32>
    tpu.vector_store %arg5[%c64, %c0_22], %67 {strides = array<i32>} : memref<72x512xf32, #tpu.memory_space<vmem>>, vector<8x256xf32>,
    %c1 = arith.constant 1 : index
    %c0_23 = arith.constant 0 : index
    %c0_24 = arith.constant 0 : index
    %69 = vector.load %arg1[%c1, %c0_23, %c0_24] : memref<2x4x256xf32, #tpu.memory_space<vmem>>, vector<1x4x256xf32>
    %70 = vector.shape_cast %69 : vector<1x4x256xf32> to vector<4x256xf32>
    %cst_25 = arith.constant 0.000000e+00 : f32
    %71 = vector.broadcast %cst_25 : f32 to vector<4x256xf32>
    %72 = tpu.concatenate %70, %71 in 0 : vector<4x256xf32>, vector<4x256xf32> -> vector<8x256xf32>
    %cst_26 = arith.constant 0.000000e+00 : f32
    %73 = vector.broadcast %cst_26 : f32 to vector<8x17xf32>
    %74 = tpu.concatenate %73, %72, %73 in 1 : vector<8x17xf32>, vector<8x256xf32>, vector<8x17xf32> -> vector<8x290xf32>
    %75 = vector.extract_strided_slice %74 {offsets = [0, 0], sizes = [8, 256], strides = [1, 1]} : vector<8x290xf32> to vector<8x256xf32>
    %cst_27 = arith.constant 0.000000e+00 : f32
    %76 = vector.broadcast %cst_27 : f32 to vector<8x256xf32>
    %77 = vector.shape_cast %18 : vector<1x256xi1> to vector<1x256xi1>
    %78 = vector.broadcast %77 : vector<1x256xi1> to vector<8x256xi1>
    %79 = arith.select %78, %75, %76 : vector<8x256xi1>, vector<8x256xf32>
    %c0_28 = arith.constant 0 : index
    %c256 = arith.constant 256 : index
    %80 = vector.load %arg5[%c0_28, %c256] : memref<72x512xf32, #tpu.memory_space<vmem>>, vector<8x256xf32>
    tpu.vector_store %arg5[%c0_28, %c256], %79 {strides = array<i32>} : memref<72x512xf32, #tpu.memory_space<vmem>>, vector<8x256xf32>,
    %81 = vector.extract_strided_slice %74 {offsets = [0, 1], sizes = [8, 256], strides = [1, 1]} : vector<8x290xf32> to vector<8x256xf32>
    %c8_29 = arith.constant 8 : index
    %c256_30 = arith.constant 256 : index
    %82 = vector.load %arg5[%c8_29, %c256_30] : memref<72x512xf32, #tpu.memory_space<vmem>>, vector<8x256xf32>
    tpu.vector_store %arg5[%c8_29, %c256_30], %81 {strides = array<i32>} : memref<72x512xf32, #tpu.memory_space<vmem>>, vector<8x256xf32>,
    %83 = vector.extract_strided_slice %74 {offsets = [0, 2], sizes = [8, 256], strides = [1, 1]} : vector<8x290xf32> to vector<8x256xf32>
    %cst_31 = arith.constant 0.000000e+00 : f32
    %84 = vector.broadcast %cst_31 : f32 to vector<8x256xf32>
    %85 = vector.shape_cast %20 : vector<1x256xi1> to vector<1x256xi1>
    %86 = vector.broadcast %85 : vector<1x256xi1> to vector<8x256xi1>
    %87 = arith.select %86, %83, %84 : vector<8x256xi1>, vector<8x256xf32>
    %c16_32 = arith.constant 16 : index
    %c256_33 = arith.constant 256 : index
    %88 = vector.load %arg5[%c16_32, %c256_33] : memref<72x512xf32, #tpu.memory_space<vmem>>, vector<8x256xf32>
    tpu.vector_store %arg5[%c16_32, %c256_33], %87 {strides = array<i32>} : memref<72x512xf32, #tpu.memory_space<vmem>>, vector<8x256xf32>,
    %89 = vector.extract_strided_slice %74 {offsets = [0, 16], sizes = [8, 256], strides = [1, 1]} : vector<8x290xf32> to vector<8x256xf32>
    %cst_34 = arith.constant 0.000000e+00 : f32
    %90 = vector.broadcast %cst_34 : f32 to vector<8x256xf32>
    %91 = vector.shape_cast %18 : vector<1x256xi1> to vector<1x256xi1>
    %92 = vector.broadcast %91 : vector<1x256xi1> to vector<8x256xi1>
    %93 = arith.select %92, %89, %90 : vector<8x256xi1>, vector<8x256xf32>
    %c24_35 = arith.constant 24 : index
    %c256_36 = arith.constant 256 : index
    %94 = vector.load %arg5[%c24_35, %c256_36] : memref<72x512xf32, #tpu.memory_space<vmem>>, vector<8x256xf32>
    tpu.vector_store %arg5[%c24_35, %c256_36], %93 {strides = array<i32>} : memref<72x512xf32, #tpu.memory_space<vmem>>, vector<8x256xf32>,
    %95 = vector.extract_strided_slice %74 {offsets = [0, 17], sizes = [8, 256], strides = [1, 1]} : vector<8x290xf32> to vector<8x256xf32>
    %c32_37 = arith.constant 32 : index
    %c256_38 = arith.constant 256 : index
    %96 = vector.load %arg5[%c32_37, %c256_38] : memref<72x512xf32, #tpu.memory_space<vmem>>, vector<8x256xf32>
    tpu.vector_store %arg5[%c32_37, %c256_38], %95 {strides = array<i32>} : memref<72x512xf32, #tpu.memory_space<vmem>>, vector<8x256xf32>,
    %97 = vector.extract_strided_slice %74 {offsets = [0, 18], sizes = [8, 256], strides = [1, 1]} : vector<8x290xf32> to vector<8x256xf32>
    %cst_39 = arith.constant 0.000000e+00 : f32
    %98 = vector.broadcast %cst_39 : f32 to vector<8x256xf32>
    %99 = vector.shape_cast %20 : vector<1x256xi1> to vector<1x256xi1>
    %100 = vector.broadcast %99 : vector<1x256xi1> to vector<8x256xi1>
    %101 = arith.select %100, %97, %98 : vector<8x256xi1>, vector<8x256xf32>
    %c40_40 = arith.constant 40 : index
    %c256_41 = arith.constant 256 : index
    %102 = vector.load %arg5[%c40_40, %c256_41] : memref<72x512xf32, #tpu.memory_space<vmem>>, vector<8x256xf32>
    tpu.vector_store %arg5[%c40_40, %c256_41], %101 {strides = array<i32>} : memref<72x512xf32, #tpu.memory_space<vmem>>, vector<8x256xf32>,
    %103 = vector.extract_strided_slice %74 {offsets = [0, 32], sizes = [8, 256], strides = [1, 1]} : vector<8x290xf32> to vector<8x256xf32>
    %cst_42 = arith.constant 0.000000e+00 : f32
    %104 = vector.broadcast %cst_42 : f32 to vector<8x256xf32>
    %105 = vector.shape_cast %18 : vector<1x256xi1> to vector<1x256xi1>
    %106 = vector.broadcast %105 : vector<1x256xi1> to vector<8x256xi1>
    %107 = arith.select %106, %103, %104 : vector<8x256xi1>, vector<8x256xf32>
    %c48_43 = arith.constant 48 : index
    %c256_44 = arith.constant 256 : index
    %108 = vector.load %arg5[%c48_43, %c256_44] : memref<72x512xf32, #tpu.memory_space<vmem>>, vector<8x256xf32>
    tpu.vector_store %arg5[%c48_43, %c256_44], %107 {strides = array<i32>} : memref<72x512xf32, #tpu.memory_space<vmem>>, vector<8x256xf32>,
    %109 = vector.extract_strided_slice %74 {offsets = [0, 33], sizes = [8, 256], strides = [1, 1]} : vector<8x290xf32> to vector<8x256xf32>
    %c56_45 = arith.constant 56 : index
    %c256_46 = arith.constant 256 : index
    %110 = vector.load %arg5[%c56_45, %c256_46] : memref<72x512xf32, #tpu.memory_space<vmem>>, vector<8x256xf32>
    tpu.vector_store %arg5[%c56_45, %c256_46], %109 {strides = array<i32>} : memref<72x512xf32, #tpu.memory_space<vmem>>, vector<8x256xf32>,
    %111 = vector.extract_strided_slice %74 {offsets = [0, 34], sizes = [8, 256], strides = [1, 1]} : vector<8x290xf32> to vector<8x256xf32>
    %cst_47 = arith.constant 0.000000e+00 : f32
    %112 = vector.broadcast %cst_47 : f32 to vector<8x256xf32>
    %113 = vector.shape_cast %20 : vector<1x256xi1> to vector<1x256xi1>
    %114 = vector.broadcast %113 : vector<1x256xi1> to vector<8x256xi1>
    %115 = arith.select %114, %111, %112 : vector<8x256xi1>, vector<8x256xf32>
    %c64_48 = arith.constant 64 : index
    %c256_49 = arith.constant 256 : index
    %116 = vector.load %arg5[%c64_48, %c256_49] : memref<72x512xf32, #tpu.memory_space<vmem>>, vector<8x256xf32>
    tpu.vector_store %arg5[%c64_48, %c256_49], %115 {strides = array<i32>} : memref<72x512xf32, #tpu.memory_space<vmem>>, vector<8x256xf32>,
    %c0_50 = arith.constant 0 : index
    %c0_51 = arith.constant 0 : index
    %117 = vector.load %arg2[%c0_50, %c0_51] : memref<8x72xf32, #tpu.memory_space<vmem>>, vector<8x72xf32>
    %c0_52 = arith.constant 0 : index
    %c0_53 = arith.constant 0 : index
    %118 = vector.load %arg5[%c0_52, %c0_53] : memref<72x512xf32, #tpu.memory_space<vmem>>, vector<72x512xf32>
    %cst_54 = arith.constant dense<0.000000e+00> : vector<8x512xf32>
    %119 = tpu.matmul %117, %118, %cst_54 {dimension_numbers = #tpu.dot_dimension_numbers<[1], [0], [0], [1], [0, 0, 1, 1], [], []>} : vector<8x72xf32>, vector<72x512xf32>, vector<8x512xf32> -> vector<8x512xf32>
    %c0_55 = arith.constant 0 : index
    %c0_56 = arith.constant 0 : index
    %120 = vector.load %arg3[%c0_55, %c0_56] : memref<8x1xf32, #tpu.memory_space<vmem>>, vector<8x1xf32>
    %121 = vector.broadcast %120 : vector<8x1xf32> to vector<8x512xf32>
    %122 = arith.addf %119, %121 : vector<8x512xf32>
    %cst_57 = arith.constant 0.000000e+00 : f32
    %123 = vector.broadcast %cst_57 : f32 to vector<8x512xf32>
    %124 = arith.maximumf %122, %123 : vector<8x512xf32>
    %125 = vector.extract_strided_slice %124 {offsets = [0, 0], sizes = [8, 256], strides = [1, 1]} : vector<8x512xf32> to vector<8x256xf32>
    %c0_58 = arith.constant 0 : index
    %c0_59 = arith.constant 0 : index
    %c0_60 = arith.constant 0 : index
    %126 = vector.load %arg4[%c0_58, %c0_59, %c0_60] : memref<2x8x256xf32, #tpu.memory_space<vmem>>, vector<1x8x256xf32>
    %127 = vector.shape_cast %126 : vector<1x8x256xf32> to vector<8x256xf32>
    %128 = vector.shape_cast %125 : vector<8x256xf32> to vector<1x8x256xf32>
    tpu.vector_store %arg4[%c0_58, %c0_59, %c0_60], %128 {strides = array<i32>} : memref<2x8x256xf32, #tpu.memory_space<vmem>>, vector<1x8x256xf32>,
    %129 = vector.extract_strided_slice %124 {offsets = [0, 256], sizes = [8, 256], strides = [1, 1]} : vector<8x512xf32> to vector<8x256xf32>
    %c1_61 = arith.constant 1 : index
    %c0_62 = arith.constant 0 : index
    %c0_63 = arith.constant 0 : index
    %130 = vector.load %arg4[%c1_61, %c0_62, %c0_63] : memref<2x8x256xf32, #tpu.memory_space<vmem>>, vector<1x8x256xf32>
    %131 = vector.shape_cast %130 : vector<1x8x256xf32> to vector<8x256xf32>
    %132 = vector.shape_cast %129 : vector<8x256xf32> to vector<1x8x256xf32>
    tpu.vector_store %arg4[%c1_61, %c0_62, %c0_63], %132 {strides = array<i32>} : memref<2x8x256xf32, #tpu.memory_space<vmem>>, vector<1x8x256xf32>,
    return
  }
  func.func @transform_0(%arg0: i32) -> (i32, i32, i32) {
    %c0_i32 = arith.constant 0 : i32
    %c0_i32_0 = arith.constant 0 : i32
    %c0_i32_1 = arith.constant 0 : i32
    return %arg0, %c0_i32, %c0_i32_0 : i32, i32, i32
  }
  func.func @transform_1(%arg0: i32) -> (i32, i32) {
    %c0_i32 = arith.constant 0 : i32
    %c0_i32_0 = arith.constant 0 : i32
    %c0_i32_1 = arith.constant 0 : i32
    return %c0_i32, %c0_i32_0 : i32, i32
  }
  func.func @transform_2(%arg0: i32) -> (i32, i32) {
    %c0_i32 = arith.constant 0 : i32
    %c0_i32_0 = arith.constant 0 : i32
    %c0_i32_1 = arith.constant 0 : i32
    return %c0_i32, %c0_i32_0 : i32, i32
  }
  func.func @transform_3(%arg0: i32) -> (i32, i32, i32) {
    %c0_i32 = arith.constant 0 : i32
    %c0_i32_0 = arith.constant 0 : i32
    %c0_i32_1 = arith.constant 0 : i32
    return %arg0, %c0_i32, %c0_i32_0 : i32, i32, i32
  }
}

</mosaic_0001>

<llo_original>
// kernel: tpu_custom_call.1
$region0: #{tpu_custom_call.1}
  #allocation0 [shape = 'u32[]', space=smem, size = 0x4, offset = 0x4, fixed_abs, tag = 'smem constant byte address 0x4 - core index']
  #allocation1 [shape = 'u32[72,128]{1,0:T(1,128)}', space=vmem, size = 0x9000, scoped, tag = 'internal scratch']
  #allocation2 [shape = 'f32[72,512]{1,0:T(8,128)}', space=vmem, size = 0x24000, scoped, tag = 'scratch operand']
  %s0 = inlined_call_operand.hbm [shape: f32[2,4,256], index: 0, kind: input, shape index: {}]
  %s1 = inlined_call_operand.vmem [shape: f32[8,72], index: 1, kind: input, shape index: {}]
  %s2 = inlined_call_operand.vmem [shape: f32[8,1], index: 2, kind: input, shape index: {}]
  %s3 = inlined_call_operand.hbm [shape: f32[2,8,256], index: 3, kind: output, shape index: {}]
  %s4 = sld [smem:[#allocation0]]
  $region26: #{tpu_custom_call.1} parent=0
    _
  %s6 = ssub.s32 1, %s4
  %s7 = scalar_select 0, %s6, %s4
  $region1: #{tpu_custom_call.1} parent=0
    #allocation3 [shape = 'u8[8192]{0}', space=vmem, size = 0x2000, scoped, tag = 'input window, operand 0, single buffered']
    #allocation4 [shape = 's32[1]{0}', space=sflag, size = 0x4, scoped, tag = 'scoped memory for tpu_custom_call.1']
    #allocation5 [shape = 's32[1]{0}', space=sflag, size = 0x4, scoped, tag = 'scoped memory for tpu_custom_call.1']
    #allocation6 [shape = 'u8[16384]{0}', space=vmem, size = 0x4000, scoped, tag = 'output window, operand 0, single buffered']
    %8 = vsyncpa [#allocation4], 0
    %9 = vsyncpa [#allocation5], 0
    // Predicated region
    $region2: #{tpu_custom_call.1} parent=1 // pred_check
      _
    $region3: #{tpu_custom_call.1} parent=1 // pred_check_branch
      %11 = sbr.rel (0) target = $region5
    $region4: #{tpu_custom_call.1} parent=1 // pred_region
      %13 = vsyncadd [#allocation4], 0
      %s14 = sshll.u32 %s0, 4
      %s15 = int_to_ptr.hbm [resolvable:$true] %s14
      %s16 = sshll.u32 [#allocation3], 4
      %s17 = int_to_ptr.vmem [resolvable:$true] %s16
      %22 = dma.hbm_to_vmem [thread:$0]  %s15, 256, %s17, [#allocation4], 128, 128, 8
    $region5: #{tpu_custom_call.1} parent=1 // pred_fallthru
      _
    // Predicated region
    $region6: #{tpu_custom_call.1} parent=1 // pred_check
      _
    $region7: #{tpu_custom_call.1} parent=1 // pred_check_branch
      %24 = sbr.rel (0) target = $region9
    $region8: #{tpu_custom_call.1} parent=1 // pred_region
      _
    $region9: #{tpu_custom_call.1} parent=1 // pred_fallthru
      _
    // Predicated region
    $region10: #{tpu_custom_call.1} parent=1 // pred_check
      _
    $region11: #{tpu_custom_call.1} parent=1 // pred_check_branch
      %26 = sbr.rel (0) target = $region13
    $region12: #{tpu_custom_call.1} parent=1 // pred_region
      _
    $region13: #{tpu_custom_call.1} parent=1 // pred_fallthru
      _
    // Predicated region
    $region14: #{tpu_custom_call.1} parent=1 // pred_check
      _
    $region15: #{tpu_custom_call.1} parent=1 // pred_check_branch
      %28 = sbr.rel (0) target = $region17
    $region16: #{tpu_custom_call.1} parent=1 // pred_region
      %30 = dma.done [#allocation4], 256
    $region17: #{tpu_custom_call.1} parent=1 // pred_fallthru
      _
    %v31 = vlaneseq
    %v32 = vand.u32 %v31, 127
    %v33 = vadd.s32 %v32, 128
    %vm34 = vcmp.lt.s32.totalorder %v32, 0
    %v35 = vsub.s32 0, %v32
    %v36 = vsel %vm34, %v35, %v32
    %v37 = vshrl.u32 %v36, 4
    %v38 = vand.u32 %v36, 15
    %v39 = vsub.s32 0, %v38
    %v40 = vsel %vm34, %v39, %v38
    %vm41 = vcmp.lt.s32.totalorder %v33, 0
    %v42 = vsub.s32 0, %v33
    %v43 = vsel %vm41, %v42, %v33
    %v44 = vshrl.u32 %v43, 4
    %v45 = vand.u32 %v43, 15
    %v46 = vsub.s32 0, %v45
    %v47 = vsel %vm41, %v46, %v45
    %vm48 = vcmp.ne.s32.totalorder %v40, 0
    %vm49 = vcmp.ne.s32.totalorder %v47, 0
    %vm50 = vcmp.lt.s32.totalorder %v40, 0
    %vm51 = vcmp.lt.s32.totalorder %v47, 0
    %vm52 = vmand %vm50, %vm48
    %vm53 = vmand %vm51, %vm49
    %v54 = vadd.s32 %v40, 16
    %v55 = vadd.s32 %v47, 16
    %v56 = vsel %vm52, %v54, %v40
    %v57 = vsel %vm53, %v55, %v47
    %vm58 = vcmp.ge.s32.totalorder %v56, 1
    %vm59 = vcmp.ge.s32.totalorder %v57, 1
    %vm60 = vcmp.le.s32.totalorder %v56, 14
    %vm61 = vcmp.le.s32.totalorder %v57, 14
    %v62 = vld [vmem:[#allocation3] sm:$0xff]
    %64 = vst [vmem:[#allocation1] ss:$2 sm:$0xff] %v62
    %v65 = vld.sshfl [vmem:[#allocation1] sm:$0xff pattern:$0x75316420]
    %v66 = vld.sshfl [vmem:[#allocation1 + $0x8] sm:$0xff pattern:$0x75316420]
    %vm69 = vcmask 1043456
    %v70 = vsel %vm69, %v65, 0.0
    %v71 = vsel %vm69, %v66, 0.0
    %74 = vrot.lane.b32.xlu0 %v70, 17
    %v75 = vpop.permute.xlu0 %74
    %76 = vrot.lane.b32.xlu0 %v71, 17
    %v77 = vpop.permute.xlu0 %76
    %vm78 = vcmask 138240
    %v79 = vsel %vm78, %v75, %v77
    %v83 = vsel %vm78, 0.0, %v75
    %v84 = vsel %vm78, %v77, 0.0
    %v85 = vsel %vm58, 1, 0
    %v86 = vsel %vm59, 1, 0
    %vm87 = vcmp.eq.s32.totalorder %v85, 1
    %vm88 = vcmp.eq.s32.totalorder %v86, 1
    %v89 = vsel %vm87, %v83, 0.0
    %v90 = vsel %vm88, %v79, 0.0
    %91 = vst [vmem:[#allocation2] sm:$0xff] %v89
    %92 = vst [vmem:[#allocation2 + $0x8] sm:$0xff] %v90
    %95 = vrot.lane.b32.xlu0 %v83, 127
    %v96 = vpop.permute.xlu0 %95
    %97 = vrot.lane.b32.xlu0 %v79, 127
    %v98 = vpop.permute.xlu0 %97
    %99 = vrot.lane.b32.xlu0 %v84, 127
    %v100 = vpop.permute.xlu0 %99
    %vm101 = vcmask 1039360
    %v102 = vsel %vm101, %v96, %v98
    %v103 = vsel %vm101, %v98, %v100
    %106 = vst [vmem:[#allocation2 + $0x20] sm:$0xff] %v102
    %107 = vst [vmem:[#allocation2 + $0x28] sm:$0xff] %v103
    %v108 = vsel %vm60, 1, 0
    %v109 = vsel %vm61, 1, 0
    %vm110 = vcmp.eq.s32.totalorder %v108, 1
    %vm111 = vcmp.eq.s32.totalorder %v109, 1
    %112 = vrot.lane.b32.xlu0 %v83, 126
    %v113 = vpop.permute.xlu0 %112
    %114 = vrot.lane.b32.xlu0 %v79, 126
    %v115 = vpop.permute.xlu0 %114
    %116 = vrot.lane.b32.xlu0 %v84, 126
    %v117 = vpop.permute.xlu0 %116
    %vm118 = vcmask 1031168
    %v119 = vsel %vm118, %v113, %v115
    %v120 = vsel %vm118, %v115, %v117
    %v123 = vsel %vm110, %v119, 0.0
    %v124 = vsel %vm111, %v120, 0.0
    %125 = vst [vmem:[#allocation2 + $0x40] sm:$0xff] %v123
    %126 = vst [vmem:[#allocation2 + $0x48] sm:$0xff] %v124
    %127 = vrot.lane.b32.xlu0 %v83, 112
    %v128 = vpop.permute.xlu0 %127
    %129 = vrot.lane.b32.xlu0 %v79, 112
    %v130 = vpop.permute.xlu0 %129
    %131 = vrot.lane.b32.xlu0 %v84, 112
    %v132 = vpop.permute.xlu0 %131
    %vm133 = vcmask 916480
    %v134 = vsel %vm133, %v128, %v130
    %v135 = vsel %vm133, %v130, %v132
    %v138 = vsel %vm87, %v134, 0.0
    %v139 = vsel %vm88, %v135, 0.0
    %140 = vst [vmem:[#allocation2 + $0x60] sm:$0xff] %v138
    %141 = vst [vmem:[#allocation2 + $0x68] sm:$0xff] %v139
    %142 = vrot.lane.b32.xlu0 %v83, 111
    %v143 = vpop.permute.xlu0 %142
    %144 = vrot.lane.b32.xlu0 %v79, 111
    %v145 = vpop.permute.xlu0 %144
    %146 = vrot.lane.b32.xlu0 %v84, 111
    %v147 = vpop.permute.xlu0 %146
    %vm148 = vcmask 908288
    %v149 = vsel %vm148, %v143, %v145
    %v150 = vsel %vm148, %v145, %v147
    %153 = vst [vmem:[#allocation2 + $0x80] sm:$0xff] %v149
    %154 = vst [vmem:[#allocation2 + $0x88] sm:$0xff] %v150
    %155 = vrot.lane.b32.xlu0 %v83, 110
    %v156 = vpop.permute.xlu0 %155
    %157 = vrot.lane.b32.xlu0 %v79, 110
    %v158 = vpop.permute.xlu0 %157
    %159 = vrot.lane.b32.xlu0 %v84, 110
    %v160 = vpop.permute.xlu0 %159
    %vm161 = vcmask 900096
    %v162 = vsel %vm161, %v156, %v158
    %v163 = vsel %vm161, %v158, %v160
    %v166 = vsel %vm110, %v162, 0.0
    %v167 = vsel %vm111, %v163, 0.0
    %168 = vst [vmem:[#allocation2 + $0xa0] sm:$0xff] %v166
    %169 = vst [vmem:[#allocation2 + $0xa8] sm:$0xff] %v167
    %170 = vrot.lane.b32.xlu0 %v83, 96
    %v171 = vpop.permute.xlu0 %170
    %172 = vrot.lane.b32.xlu0 %v79, 96
    %v173 = vpop.permute.xlu0 %172
    %174 = vrot.lane.b32.xlu0 %v84, 96
    %v175 = vpop.permute.xlu0 %174
    %vm176 = vcmask 785408
    %v177 = vsel %vm176, %v171, %v173
    %v178 = vsel %vm176, %v173, %v175
    %v181 = vsel %vm87, %v177, 0.0
    %v182 = vsel %vm88, %v178, 0.0
    %183 = vst [vmem:[#allocation2 + $0xc0] sm:$0xff] %v181
    %184 = vst [vmem:[#allocation2 + $0xc8] sm:$0xff] %v182
    %185 = vrot.lane.b32.xlu0 %v83, 95
    %v186 = vpop.permute.xlu0 %185
    %187 = vrot.lane.b32.xlu0 %v79, 95
    %v188 = vpop.permute.xlu0 %187
    %189 = vrot.lane.b32.xlu0 %v84, 95
    %v190 = vpop.permute.xlu0 %189
    %vm191 = vcmask 777216
    %v192 = vsel %vm191, %v186, %v188
    %v193 = vsel %vm191, %v188, %v190
    %196 = vst [vmem:[#allocation2 + $0xe0] sm:$0xff] %v192
    %197 = vst [vmem:[#allocation2 + $0xe8] sm:$0xff] %v193
    %198 = vrot.lane.b32.xlu0 %v83, 94
    %v199 = vpop.permute.xlu0 %198
    %200 = vrot.lane.b32.xlu0 %v79, 94
    %v201 = vpop.permute.xlu0 %200
    %202 = vrot.lane.b32.xlu0 %v84, 94
    %v203 = vpop.permute.xlu0 %202
    %vm204 = vcmask 769024
    %v205 = vsel %vm204, %v199, %v201
    %v206 = vsel %vm204, %v201, %v203
    %v209 = vsel %vm110, %v205, 0.0
    %v210 = vsel %vm111, %v206, 0.0
    %211 = vst [vmem:[#allocation2 + $0x100] sm:$0xff] %v209
    %212 = vst [vmem:[#allocation2 + $0x108] sm:$0xff] %v210
    %s213 = scalar_lea.vmem [#allocation3], 8
    %v214 = vld [vmem:[%s213] sm:$0xff]
    %216 = vst [vmem:[#allocation1] ss:$2 sm:$0xff] %v214
    %v217 = vld.sshfl [vmem:[#allocation1] sm:$0xff pattern:$0x75316420]
    %v218 = vld.sshfl [vmem:[#allocation1 + $0x8] sm:$0xff pattern:$0x75316420]
    %v221 = vsel %vm69, %v217, 0.0
    %v222 = vsel %vm69, %v218, 0.0
    %225 = vrot.lane.b32.xlu0 %v221, 17
    %v226 = vpop.permute.xlu0 %225
    %227 = vrot.lane.b32.xlu0 %v222, 17
    %v228 = vpop.permute.xlu0 %227
    %v229 = vsel %vm78, %v226, %v228
    %v233 = vsel %vm78, 0.0, %v226
    %v234 = vsel %vm78, %v228, 0.0
    %v235 = vsel %vm87, %v233, 0.0
    %v236 = vsel %vm88, %v229, 0.0
    %237 = vst [vmem:[#allocation2 + $0x10] sm:$0xff] %v235
    %238 = vst [vmem:[#allocation2 + $0x18] sm:$0xff] %v236
    %241 = vrot.lane.b32.xlu0 %v233, 127
    %v242 = vpop.permute.xlu0 %241
    %243 = vrot.lane.b32.xlu0 %v229, 127
    %v244 = vpop.permute.xlu0 %243
    %245 = vrot.lane.b32.xlu0 %v234, 127
    %v246 = vpop.permute.xlu0 %245
    %v247 = vsel %vm101, %v242, %v244
    %v248 = vsel %vm101, %v244, %v246
    %251 = vst [vmem:[#allocation2 + $0x30] sm:$0xff] %v247
    %252 = vst [vmem:[#allocation2 + $0x38] sm:$0xff] %v248
    %253 = vrot.lane.b32.xlu0 %v233, 126
    %v254 = vpop.permute.xlu0 %253
    %255 = vrot.lane.b32.xlu0 %v229, 126
    %v256 = vpop.permute.xlu0 %255
    %257 = vrot.lane.b32.xlu0 %v234, 126
    %v258 = vpop.permute.xlu0 %257
    %v259 = vsel %vm118, %v254, %v256
    %v260 = vsel %vm118, %v256, %v258
    %v263 = vsel %vm110, %v259, 0.0
    %v264 = vsel %vm111, %v260, 0.0
    %265 = vst [vmem:[#allocation2 + $0x50] sm:$0xff] %v263
    %266 = vst [vmem:[#allocation2 + $0x58] sm:$0xff] %v264
    %267 = vrot.lane.b32.xlu0 %v233, 112
    %v268 = vpop.permute.xlu0 %267
    %269 = vrot.lane.b32.xlu0 %v229, 112
    %v270 = vpop.permute.xlu0 %269
    %271 = vrot.lane.b32.xlu0 %v234, 112
    %v272 = vpop.permute.xlu0 %271
    %v273 = vsel %vm133, %v268, %v270
    %v274 = vsel %vm133, %v270, %v272
    %v277 = vsel %vm87, %v273, 0.0
    %v278 = vsel %vm88, %v274, 0.0
    %279 = vst [vmem:[#allocation2 + $0x70] sm:$0xff] %v277
    %280 = vst [vmem:[#allocation2 + $0x78] sm:$0xff] %v278
    %281 = vrot.lane.b32.xlu0 %v233, 111
    %v282 = vpop.permute.xlu0 %281
    %283 = vrot.lane.b32.xlu0 %v229, 111
    %v284 = vpop.permute.xlu0 %283
    %285 = vrot.lane.b32.xlu0 %v234, 111
    %v286 = vpop.permute.xlu0 %285
    %v287 = vsel %vm148, %v282, %v284
    %v288 = vsel %vm148, %v284, %v286
    %291 = vst [vmem:[#allocation2 + $0x90] sm:$0xff] %v287
    %292 = vst [vmem:[#allocation2 + $0x98] sm:$0xff] %v288
    %293 = vrot.lane.b32.xlu0 %v233, 110
    %v294 = vpop.permute.xlu0 %293
    %295 = vrot.lane.b32.xlu0 %v229, 110
    %v296 = vpop.permute.xlu0 %295
    %297 = vrot.lane.b32.xlu0 %v234, 110
    %v298 = vpop.permute.xlu0 %297
    %v299 = vsel %vm161, %v294, %v296
    %v300 = vsel %vm161, %v296, %v298
    %v303 = vsel %vm110, %v299, 0.0
    %v304 = vsel %vm111, %v300, 0.0
    %305 = vst [vmem:[#allocation2 + $0xb0] sm:$0xff] %v303
    %306 = vst [vmem:[#allocation2 + $0xb8] sm:$0xff] %v304
    %307 = vrot.lane.b32.xlu0 %v233, 96
    %v308 = vpop.permute.xlu0 %307
    %309 = vrot.lane.b32.xlu0 %v229, 96
    %v310 = vpop.permute.xlu0 %309
    %311 = vrot.lane.b32.xlu0 %v234, 96
    %v312 = vpop.permute.xlu0 %311
    %v313 = vsel %vm176, %v308, %v310
    %v314 = vsel %vm176, %v310, %v312
    %v317 = vsel %vm87, %v313, 0.0
    %v318 = vsel %vm88, %v314, 0.0
    %319 = vst [vmem:[#allocation2 + $0xd0] sm:$0xff] %v317
    %320 = vst [vmem:[#allocation2 + $0xd8] sm:$0xff] %v318
    %321 = vrot.lane.b32.xlu0 %v233, 95
    %v322 = vpop.permute.xlu0 %321
    %323 = vrot.lane.b32.xlu0 %v229, 95
    %v324 = vpop.permute.xlu0 %323
    %325 = vrot.lane.b32.xlu0 %v234, 95
    %v326 = vpop.permute.xlu0 %325
    %v327 = vsel %vm191, %v322, %v324
    %v328 = vsel %vm191, %v324, %v326
    %331 = vst [vmem:[#allocation2 + $0xf0] sm:$0xff] %v327
    %332 = vst [vmem:[#allocation2 + $0xf8] sm:$0xff] %v328
    %333 = vrot.lane.b32.xlu0 %v233, 94
    %v334 = vpop.permute.xlu0 %333
    %335 = vrot.lane.b32.xlu0 %v229, 94
    %v336 = vpop.permute.xlu0 %335
    %337 = vrot.lane.b32.xlu0 %v234, 94
    %v338 = vpop.permute.xlu0 %337
    %v339 = vsel %vm204, %v334, %v336
    %v340 = vsel %vm204, %v336, %v338
    %v343 = vsel %vm110, %v339, 0.0
    %v344 = vsel %vm111, %v340, 0.0
    %345 = vst [vmem:[#allocation2 + $0x110] sm:$0xff] %v343
    %346 = vst [vmem:[#allocation2 + $0x118] sm:$0xff] %v344
    %v347 = vld [vmem:[%s1] sm:$0xff]
    %v348 = vld [vmem:[#allocation2] sm:$0xff]
    %v349 = vld [vmem:[#allocation2 + $0x8] sm:$0xff]
    %v350 = vld [vmem:[#allocation2 + $0x10] sm:$0xff]
    %v351 = vld [vmem:[#allocation2 + $0x18] sm:$0xff]
    %v352 = vld [vmem:[#allocation2 + $0x20] sm:$0xff]
    %v353 = vld [vmem:[#allocation2 + $0x28] sm:$0xff]
    %v354 = vld [vmem:[#allocation2 + $0x30] sm:$0xff]
    %v355 = vld [vmem:[#allocation2 + $0x38] sm:$0xff]
    %v356 = vld [vmem:[#allocation2 + $0x40] sm:$0xff]
    %v357 = vld [vmem:[#allocation2 + $0x48] sm:$0xff]
    %v358 = vld [vmem:[#allocation2 + $0x50] sm:$0xff]
    %v359 = vld [vmem:[#allocation2 + $0x58] sm:$0xff]
    %v360 = vld [vmem:[#allocation2 + $0x60] sm:$0xff]
    %v361 = vld [vmem:[#allocation2 + $0x68] sm:$0xff]
    %v362 = vld [vmem:[#allocation2 + $0x70] sm:$0xff]
    %v363 = vld [vmem:[#allocation2 + $0x78] sm:$0xff]
    %v364 = vld [vmem:[#allocation2 + $0x80] sm:$0xff]
    %v365 = vld [vmem:[#allocation2 + $0x88] sm:$0xff]
    %v366 = vld [vmem:[#allocation2 + $0x90] sm:$0xff]
    %v367 = vld [vmem:[#allocation2 + $0x98] sm:$0xff]
    %v368 = vld [vmem:[#allocation2 + $0xa0] sm:$0xff]
    %v369 = vld [vmem:[#allocation2 + $0xa8] sm:$0xff]
    %v370 = vld [vmem:[#allocation2 + $0xb0] sm:$0xff]
    %v371 = vld [vmem:[#allocation2 + $0xb8] sm:$0xff]
    %v372 = vld [vmem:[#allocation2 + $0xc0] sm:$0xff]
    %v373 = vld [vmem:[#allocation2 + $0xc8] sm:$0xff]
    %v374 = vld [vmem:[#allocation2 + $0xd0] sm:$0xff]
    %v375 = vld [vmem:[#allocation2 + $0xd8] sm:$0xff]
    %v376 = vld [vmem:[#allocation2 + $0xe0] sm:$0xff]
    %v377 = vld [vmem:[#allocation2 + $0xe8] sm:$0xff]
    %v378 = vld [vmem:[#allocation2 + $0xf0] sm:$0xff]
    %v379 = vld [vmem:[#allocation2 + $0xf8] sm:$0xff]
    %v380 = vld [vmem:[#allocation2 + $0x100] sm:$0xff]
    %v381 = vld [vmem:[#allocation2 + $0x108] sm:$0xff]
    %v382 = vld [vmem:[#allocation2 + $0x110] sm:$0xff]
    %v383 = vld [vmem:[#allocation2 + $0x118] sm:$0xff]
    %v384 = vld [vmem:[%s2] sm:$0xff]
    %386 = vset.pattern.permute.xlu0 0
    %387 = vperm.xlu0 %386, %v384
    %v388 = vpop.permute.xlu0 %387
    %vm390 = vcmask 588800
    %v392 = vsel %vm390, %v347, 0
    %394 = vmatpush.msra.mxu0 0.0
    %395 = vmatpush.msra.mxu0 0.0
    %396 = vmatpush.msra.mxu0 0.0
    %397 = vmatpush.msra.mxu0 0.0
    %398 = vmatpush.msra.mxu0 0.0
    %399 = vmatpush.msra.mxu0 0.0
    %400 = vmatpush.msra.mxu0 0.0
    %401 = vmatpush.msra.mxu0 %v380
    %402 = vmatpush.msra.mxu0 %v376
    %403 = vmatpush.msra.mxu0 %v372
    %404 = vmatpush.msra.mxu0 %v368
    %405 = vmatpush.msra.mxu0 %v364
    %406 = vmatpush.msra.mxu0 %v360
    %407 = vmatpush.msra.mxu0 %v356
    %408 = vmatpush.msra.mxu0 %v352
    %409 = vmatpush.msra.mxu0 %v348
    %410 = vmatmul.f32.gmra.mxu0 %v392
    %v411 = vpop.f32.mrf.mxu0
    %v412 = vadd.f32 %v388, %v411
    %413 = vdwg.mxu0
    %414 = vmatpush.msra.mxu0 0.0
    %415 = vmatpush.msra.mxu0 0.0
    %416 = vmatpush.msra.mxu0 0.0
    %417 = vmatpush.msra.mxu0 0.0
    %418 = vmatpush.msra.mxu0 0.0
    %419 = vmatpush.msra.mxu0 0.0
    %420 = vmatpush.msra.mxu0 0.0
    %421 = vmatpush.msra.mxu0 %v381
    %422 = vmatpush.msra.mxu0 %v377
    %423 = vmatpush.msra.mxu0 %v373
    %424 = vmatpush.msra.mxu0 %v369
    %425 = vmatpush.msra.mxu0 %v365
    %426 = vmatpush.msra.mxu0 %v361
    %427 = vmatpush.msra.mxu0 %v357
    %428 = vmatpush.msra.mxu0 %v353
    %429 = vmatpush.msra.mxu0 %v349
    %430 = vmatmul.f32.gmra.mxu0 %v392
    %v431 = vpop.f32.mrf.mxu0
    %v432 = vadd.f32 %v388, %v431
    %433 = vdwg.mxu0
    %434 = vmatpush.msra.mxu0 0.0
    %435 = vmatpush.msra.mxu0 0.0
    %436 = vmatpush.msra.mxu0 0.0
    %437 = vmatpush.msra.mxu0 0.0
    %438 = vmatpush.msra.mxu0 0.0
    %439 = vmatpush.msra.mxu0 0.0
    %440 = vmatpush.msra.mxu0 0.0
    %441 = vmatpush.msra.mxu0 %v382
    %442 = vmatpush.msra.mxu0 %v378
    %443 = vmatpush.msra.mxu0 %v374
    %444 = vmatpush.msra.mxu0 %v370
    %445 = vmatpush.msra.mxu0 %v366
    %446 = vmatpush.msra.mxu0 %v362
    %447 = vmatpush.msra.mxu0 %v358
    %448 = vmatpush.msra.mxu0 %v354
    %449 = vmatpush.msra.mxu0 %v350
    %450 = vmatmul.f32.gmra.mxu0 %v392
    %v451 = vpop.f32.mrf.mxu0
    %v452 = vadd.f32 %v388, %v451
    %453 = vdwg.mxu0
    %454 = vmatpush.msra.mxu0 0.0
    %455 = vmatpush.msra.mxu0 0.0
    %456 = vmatpush.msra.mxu0 0.0
    %457 = vmatpush.msra.mxu0 0.0
    %458 = vmatpush.msra.mxu0 0.0
    %459 = vmatpush.msra.mxu0 0.0
    %460 = vmatpush.msra.mxu0 0.0
    %461 = vmatpush.msra.mxu0 %v383
    %462 = vmatpush.msra.mxu0 %v379
    %463 = vmatpush.msra.mxu0 %v375
    %464 = vmatpush.msra.mxu0 %v371
    %465 = vmatpush.msra.mxu0 %v367
    %466 = vmatpush.msra.mxu0 %v363
    %467 = vmatpush.msra.mxu0 %v359
    %468 = vmatpush.msra.mxu0 %v355
    %469 = vmatpush.msra.mxu0 %v351
    %470 = vmatmul.f32.gmra.mxu0 %v392
    %v471 = vpop.f32.mrf.mxu0
    %v472 = vadd.f32 %v388, %v471
    %473 = vdwg.mxu0
    %v474 = vmax.f32 %v412, 0.0
    %v475 = vmax.f32 %v432, 0.0
    %v476 = vmax.f32 %v452, 0.0
    %v477 = vmax.f32 %v472, 0.0
    %478 = vst [vmem:[#allocation6] sm:$0xff] %v474
    %479 = vst [vmem:[#allocation6 + $0x8] sm:$0xff] %v475
    %s480 = scalar_lea.vmem [#allocation6], 16
    %481 = vst [vmem:[%s480] sm:$0xff] %v476
    %482 = vst [vmem:[%s480 + $0x8] sm:$0xff] %v477
    // Predicated region
    $region18: #{tpu_custom_call.1} parent=1 // pred_check
      _
    $region19: #{tpu_custom_call.1} parent=1 // pred_check_branch
      %484 = sbr.rel (0) target = $region21
    $region20: #{tpu_custom_call.1} parent=1 // pred_region
      %486 = vsyncadd [#allocation5], 0
      %s487 = sshll.u32 [#allocation6], 4
      %s488 = int_to_ptr.vmem [resolvable:$true] %s487
      %s489 = sshll.u32 %s3, 4
      %s490 = int_to_ptr.hbm [resolvable:$true] %s489
      %495 = dma.vmem_to_hbm [thread:$0]  %s488, 512, %s490, [#allocation5], 256, 256, 16
    $region21: #{tpu_custom_call.1} parent=1 // pred_fallthru
      _
    // Predicated region
    $region22: #{tpu_custom_call.1} parent=1 // pred_check
      _
    $region23: #{tpu_custom_call.1} parent=1 // pred_check_branch
      %497 = sbr.rel (0) target = $region25
    $region24: #{tpu_custom_call.1} parent=1 // pred_region
      %499 = dma.done [#allocation5], 512
    $region25: #{tpu_custom_call.1} parent=1 // pred_fallthru
      _
    %500 = vsyncpa [#allocation4], 1
    %501 = vsyncpa [#allocation5], 1

</llo_original>
